<compile_context>
chip_gen: v7x
topology: tpu7x:2x2x1
jax: 0.10.0
libtpu: 0.0.40
codegen_flags: <defaults>
</compile_context>

<pallas_src>
import functools

import jax
import jax.numpy as jnp
from jax.experimental import pallas as pl
from jax.experimental.pallas import tpu as pltpu


def _distill_kl_kernel(num_classes, tb, tc, mask_cols,
                       inv_t_ref, s_ref, t_ref, row_ref,
                       m_s, l_s, m_t, l_t, acc):
    """Online (flash-style) per-row KL(teacher || student) over class tiles.

    inv_t_ref : (1,) f32 scalar-prefetch (SMEM), holds 1/T.
    s_ref     : (tb, tc) student logits tile (any float dtype).
    t_ref     : (tb, tc) teacher logits tile.
    row_ref   : (tb, 1) f32 per-row KL output (written at last class tile).
    m_s,l_s,m_t,l_t,acc : (tb, 1) f32 VMEM scratch accumulators.
    """
    k = pl.program_id(1)

    @pl.when(k == 0)
    def _init():
        m_s[...] = jnp.full_like(m_s, -jnp.inf)
        m_t[...] = jnp.full_like(m_t, -jnp.inf)
        l_s[...] = jnp.zeros_like(l_s)
        l_t[...] = jnp.zeros_like(l_t)
        acc[...] = jnp.zeros_like(acc)

    inv_t = inv_t_ref[0]
    s = s_ref[...].astype(jnp.float32) * inv_t
    t = t_ref[...].astype(jnp.float32) * inv_t

    if mask_cols:
        # Partial last class tile: padding lanes must never reach exp/max.
        col = jax.lax.broadcasted_iota(jnp.int32, (tb, tc), 1) + k * tc
        valid = col < num_classes
        neg = jnp.float32(-1e30)          # finite, exp() underflows to 0 exactly
        s = jnp.where(valid, s, neg)
        t = jnp.where(valid, t, neg)

    # --- student online log-sum-exp -------------------------------------
    m_s_new = jnp.maximum(m_s[...], jnp.max(s, axis=1, keepdims=True))
    l_s[...] = (l_s[...] * jnp.exp(m_s[...] - m_s_new)
                + jnp.sum(jnp.exp(s - m_s_new), axis=1, keepdims=True))
    m_s[...] = m_s_new

    # --- teacher online log-sum-exp + unnormalized cross term -----------
    m_t_new = jnp.maximum(m_t[...], jnp.max(t, axis=1, keepdims=True))
    corr = jnp.exp(m_t[...] - m_t_new)
    e_t = jnp.exp(t - m_t_new)
    l_t[...] = l_t[...] * corr + jnp.sum(e_t, axis=1, keepdims=True)
    acc[...] = acc[...] * corr + jnp.sum(e_t * (t - s), axis=1, keepdims=True)
    m_t[...] = m_t_new

    @pl.when(k == pl.num_programs(1) - 1)
    def _finalize():
        # KL_row = sum_c p_t (t - s) + (M_s - M_t) + (log L_s - log L_t)
        row_ref[...] = (acc[...] * pl.reciprocal(l_t[...], approx=False)
                        + (m_s[...] - m_t[...])
                        + (jnp.log(l_s[...]) - jnp.log(l_t[...])))


def _vmem_limit_bytes():
    """Generation-aware scoped-VMEM limit: 48 MiB on v7x (64 MiB physical),
    64 MiB on v5e/v6e (128 MiB physical)."""
    phys = 128 * 1024 * 1024
    try:
        info = pltpu.get_tpu_info()
        phys = int(getattr(info, "vmem_capacity_bytes", phys))
    except Exception:
        pass
    return min(64 * 1024 * 1024, (phys * 3) // 4)


def _pick_tiles(batch, num_classes, itemsize, vmem_limit):
    """Pick (tb, tc) so that 2 inputs x 2 pipeline buffers x tile + ~6 f32
    (tb, tc) intermediates stay comfortably inside the scoped VMEM limit."""
    per_elem = 4 * itemsize + 6 * 4          # streamed inputs + f32 temporaries
    budget = int(vmem_limit * 0.55)          # headroom for scratch/compiler
    max_elems = max(budget // per_elem, 8 * 128)

    rows_full_c = max_elems // max(num_classes, 1)
    if rows_full_c >= 8:
        # Whole class axis fits in one block: tile only the batch axis.
        tc = num_classes
        tb = max(8, (rows_full_c // 8) * 8)
        if batch <= tb:
            tb = batch                       # single block == full array dims
    else:
        # Vocab-scale C: tile the class axis too (online-LSE path).
        tb = batch if batch <= 256 else 256
        tc = max(128, (max_elems // max(tb, 1) // 128) * 128)
        tc = min(tc, num_classes)
    return tb, tc


def distillation_loss(student_output, teacher_output, T=1.0, alpha=0.5,
                      _tiles=None):
    """Pallas TPU implementation of DistillationLoss.forward.

    alpha is stored by the PyTorch module but unused in its forward; kept for
    signature parity.  `_tiles=(tb, tc)` optionally overrides the auto-picked
    tiling (used in tests to exercise the multi-tile / masked path).
    """
    del alpha  # unused in the reference forward pass
    assert student_output.shape == teacher_output.shape
    assert student_output.ndim == 2
    B, C = student_output.shape
    itemsize = jnp.dtype(student_output.dtype).itemsize

    vmem_limit = _vmem_limit_bytes()
    if _tiles is None:
        tb, tc = _pick_tiles(B, C, itemsize, vmem_limit)
    else:
        tb, tc = _tiles
    nb = pl.cdiv(B, tb)
    nc = pl.cdiv(C, tc)
    mask_cols = (C % tc) != 0

    inv_t = (jnp.float32(1.0) / jnp.asarray(T, jnp.float32)).reshape((1,))

    kernel = functools.partial(_distill_kl_kernel, C, tb, tc, mask_cols)

    row_kl = pl.pallas_call(
        kernel,
        out_shape=jax.ShapeDtypeStruct((B, 1), jnp.float32),
        grid_spec=pltpu.PrefetchScalarGridSpec(
            num_scalar_prefetch=1,                     # 1/T -> SMEM, once
            grid=(nb, nc),
            in_specs=[
                pl.BlockSpec((tb, tc), lambda i, k, inv: (i, k)),  # student
                pl.BlockSpec((tb, tc), lambda i, k, inv: (i, k)),  # teacher
            ],
            out_specs=pl.BlockSpec((tb, 1), lambda i, k, inv: (i, 0)),
            scratch_shapes=[pltpu.VMEM((tb, 1), jnp.float32)] * 5,
        ),
        compiler_params=pltpu.CompilerParams(
            dimension_semantics=("parallel", "arbitrary"),
            vmem_limit_bytes=vmem_limit,
        ),
        cost_estimate=pl.CostEstimate(
            flops=10 * B * C,
            transcendentals=2 * B * C,
            bytes_accessed=2 * B * C * itemsize + 4 * B + 4,
        ),
    )(inv_t, student_output, teacher_output)

    # Tiny trailing reduction + batchmean + T^2 scaling in plain JAX.
    t_f = jnp.asarray(T, jnp.float32)
    return jnp.sum(row_kl) * (t_f * t_f) / jnp.float32(B)


if __name__ == "__main__":
    key = jax.random.PRNGKey(0)
    k1, k2, k3, k4 = jax.random.split(key, 4)

    def ref_loss(s, t, T):
        log_sp = jax.nn.log_softmax(s.astype(jnp.float32) / T, axis=1)
        tp = jax.nn.softmax(t.astype(jnp.float32) / T, axis=1)
        return jnp.sum(tp * (jnp.log(tp) - log_sp)) / s.shape[0] * (T * T)

    # 1) Module-typical small shape, f32 logits.
    batch, num_classes = 8, 16
    student_logits = jax.random.normal(k1, (batch, num_classes), jnp.float32)
    teacher_logits = jax.random.normal(k2, (batch, num_classes), jnp.float32)
    T = 2.0
    loss = jax.block_until_ready(distillation_loss(student_logits, teacher_logits, T=T))
    ref = ref_loss(student_logits, teacher_logits, T)
    assert jnp.allclose(loss, ref, rtol=5e-4, atol=1e-6), (loss, ref)

    # 2) bf16 logits (the intended HBM dtype at real sizes); kernel promotes to f32.
    s16 = student_logits.astype(jnp.bfloat16)
    t16 = teacher_logits.astype(jnp.bfloat16)
    loss16 = jax.block_until_ready(distillation_loss(s16, t16, T=T))
    ref16 = ref_loss(s16, t16, T)
    assert jnp.allclose(loss16, ref16, rtol=2e-3, atol=1e-4), (loss16, ref16)

    # 3) Forced multi-tile grid: exercises the online-LSE class-axis path,
    #    partial class tiles (col masking) and a clipped edge batch tile.
    B2, C2 = 20, 300
    s2 = jax.random.normal(k3, (B2, C2), jnp.float32)
    t2 = jax.random.normal(k4, (B2, C2), jnp.float32)
    loss2 = jax.block_until_ready(distillation_loss(s2, t2, T=3.0, _tiles=(8, 128)))
    ref2 = ref_loss(s2, t2, 3.0)
    assert jnp.allclose(loss2, ref2, rtol=5e-4, atol=1e-5), (loss2, ref2)

    print("KERNEL_OK")
</pallas_src>

<mosaic_0001>
module attributes {stable_mosaic.version = 11 : i64} {
  func.func @_distill_kl_kernel(%arg0: i32, %arg1: i32, %arg2: memref<1xf32, #tpu.memory_space<smem>>, %arg3: memref<8x16xf32, #tpu.memory_space<vmem>>, %arg4: memref<8x16xf32, #tpu.memory_space<vmem>>, %arg5: memref<8x1xf32, #tpu.memory_space<vmem>>, %arg6: memref<8x1xf32, #tpu.memory_space<vmem>>, %arg7: memref<8x1xf32, #tpu.memory_space<vmem>>, %arg8: memref<8x1xf32, #tpu.memory_space<vmem>>, %arg9: memref<8x1xf32, #tpu.memory_space<vmem>>, %arg10: memref<8x1xf32, #tpu.memory_space<vmem>>) attributes {dimension_semantics = [#tpu.dimension_semantics<parallel>, #tpu.dimension_semantics<arbitrary>], iteration_bounds = array<i64: 1, 1>, scalar_prefetch = 1 : i64, scratch_operands = 5 : i64, tpu.core_type = #tpu.core_type<tc>, window_params = [{transform_indices = @transform_0, window_bounds = array<i64: 8, 16>}, {transform_indices = @transform_1, window_bounds = array<i64: 8, 16>}, {transform_indices = @transform_2, window_bounds = array<i64: 8, 1>}]} {
    %c0_i32 = arith.constant 0 : i32
    %0 = arith.cmpi eq, %arg1, %c0_i32 : i32
    %1 = arith.extui %0 : i1 to i32
    %c0_i32_0 = arith.constant 0 : i32
    %2 = arith.cmpi ne, %1, %c0_i32_0 : i32
    scf.if %2 {
      %cst_35 = arith.constant 0xFF800000 : f32
      %55 = vector.broadcast %cst_35 : f32 to vector<8x1xf32>
      %c0_36 = arith.constant 0 : index
      %c0_37 = arith.constant 0 : index
      %56 = vector.load %arg6[%c0_36, %c0_37] : memref<8x1xf32, #tpu.memory_space<vmem>>, vector<8x1xf32>
      tpu.vector_store %arg6[%c0_36, %c0_37], %55 {strides = array<i32>} : memref<8x1xf32, #tpu.memory_space<vmem>>, vector<8x1xf32>,
      %cst_38 = arith.constant 0xFF800000 : f32
      %57 = vector.broadcast %cst_38 : f32 to vector<8x1xf32>
      %c0_39 = arith.constant 0 : index
      %c0_40 = arith.constant 0 : index
      %58 = vector.load %arg8[%c0_39, %c0_40] : memref<8x1xf32, #tpu.memory_space<vmem>>, vector<8x1xf32>
      tpu.vector_store %arg8[%c0_39, %c0_40], %57 {strides = array<i32>} : memref<8x1xf32, #tpu.memory_space<vmem>>, vector<8x1xf32>,
      %cst_41 = arith.constant 0.000000e+00 : f32
      %59 = vector.broadcast %cst_41 : f32 to vector<8x1xf32>
      %c0_42 = arith.constant 0 : index
      %c0_43 = arith.constant 0 : index
      %60 = vector.load %arg7[%c0_42, %c0_43] : memref<8x1xf32, #tpu.memory_space<vmem>>, vector<8x1xf32>
      tpu.vector_store %arg7[%c0_42, %c0_43], %59 {strides = array<i32>} : memref<8x1xf32, #tpu.memory_space<vmem>>, vector<8x1xf32>,
      %cst_44 = arith.constant 0.000000e+00 : f32
      %61 = vector.broadcast %cst_44 : f32 to vector<8x1xf32>
      %c0_45 = arith.constant 0 : index
      %c0_46 = arith.constant 0 : index
      %62 = vector.load %arg9[%c0_45, %c0_46] : memref<8x1xf32, #tpu.memory_space<vmem>>, vector<8x1xf32>
      tpu.vector_store %arg9[%c0_45, %c0_46], %61 {strides = array<i32>} : memref<8x1xf32, #tpu.memory_space<vmem>>, vector<8x1xf32>,
      %cst_47 = arith.constant 0.000000e+00 : f32
      %63 = vector.broadcast %cst_47 : f32 to vector<8x1xf32>
      %c0_48 = arith.constant 0 : index
      %c0_49 = arith.constant 0 : index
      %64 = vector.load %arg10[%c0_48, %c0_49] : memref<8x1xf32, #tpu.memory_space<vmem>>, vector<8x1xf32>
      tpu.vector_store %arg10[%c0_48, %c0_49], %63 {strides = array<i32>} : memref<8x1xf32, #tpu.memory_space<vmem>>, vector<8x1xf32>,
    } else {
    }
    %c0 = arith.constant 0 : index
    %3 = memref.load %arg2[%c0] : memref<1xf32, #tpu.memory_space<smem>>
    %c0_1 = arith.constant 0 : index
    %c0_2 = arith.constant 0 : index
    %4 = vector.load %arg3[%c0_1, %c0_2] : memref<8x16xf32, #tpu.memory_space<vmem>>, vector<8x16xf32>
    %5 = vector.broadcast %3 : f32 to vector<8x16xf32>
    %6 = arith.mulf %4, %5 : vector<8x16xf32>
    %c0_3 = arith.constant 0 : index
    %c0_4 = arith.constant 0 : index
    %7 = vector.load %arg4[%c0_3, %c0_4] : memref<8x16xf32, #tpu.memory_space<vmem>>, vector<8x16xf32>
    %8 = vector.broadcast %3 : f32 to vector<8x16xf32>
    %9 = arith.mulf %7, %8 : vector<8x16xf32>
    %c0_5 = arith.constant 0 : index
    %c0_6 = arith.constant 0 : index
    %10 = vector.load %arg6[%c0_5, %c0_6] : memref<8x1xf32, #tpu.memory_space<vmem>>, vector<8x1xf32>
    %cst = arith.constant dense<0xFF800000> : vector<8xf32>
    %11 = vector.multi_reduction <maximumf>, %6, %cst [1] : vector<8x16xf32> to vector<8xf32>
    %12 = vector.shape_cast %11 : vector<8xf32> to vector<8x1xf32>
    %13 = arith.maximumf %10, %12 : vector<8x1xf32>
    %c0_7 = arith.constant 0 : index
    %c0_8 = arith.constant 0 : index
    %14 = vector.load %arg7[%c0_7, %c0_8] : memref<8x1xf32, #tpu.memory_space<vmem>>, vector<8x1xf32>
    %c0_9 = arith.constant 0 : index
    %c0_10 = arith.constant 0 : index
    %15 = vector.load %arg6[%c0_9, %c0_10] : memref<8x1xf32, #tpu.memory_space<vmem>>, vector<8x1xf32>
    %16 = arith.subf %15, %13 : vector<8x1xf32>
    %17 = math.exp %16 : vector<8x1xf32>
    %18 = arith.mulf %14, %17 : vector<8x1xf32>
    %19 = vector.broadcast %13 : vector<8x1xf32> to vector<8x16xf32>
    %20 = arith.subf %6, %19 : vector<8x16xf32>
    %21 = math.exp %20 : vector<8x16xf32>
    %cst_11 = arith.constant dense<0.000000e+00> : vector<8xf32>
    %22 = vector.multi_reduction <add>, %21, %cst_11 [1] : vector<8x16xf32> to vector<8xf32>
    %23 = vector.shape_cast %22 : vector<8xf32> to vector<8x1xf32>
    %24 = arith.addf %18, %23 : vector<8x1xf32>
    %c0_12 = arith.constant 0 : index
    %c0_13 = arith.constant 0 : index
    %25 = vector.load %arg7[%c0_12, %c0_13] : memref<8x1xf32, #tpu.memory_space<vmem>>, vector<8x1xf32>
    tpu.vector_store %arg7[%c0_12, %c0_13], %24 {strides = array<i32>} : memref<8x1xf32, #tpu.memory_space<vmem>>, vector<8x1xf32>,
    %c0_14 = arith.constant 0 : index
    %c0_15 = arith.constant 0 : index
    %26 = vector.load %arg6[%c0_14, %c0_15] : memref<8x1xf32, #tpu.memory_space<vmem>>, vector<8x1xf32>
    tpu.vector_store %arg6[%c0_14, %c0_15], %13 {strides = array<i32>} : memref<8x1xf32, #tpu.memory_space<vmem>>, vector<8x1xf32>,
    %c0_16 = arith.constant 0 : index
    %c0_17 = arith.constant 0 : index
    %27 = vector.load %arg8[%c0_16, %c0_17] : memref<8x1xf32, #tpu.memory_space<vmem>>, vector<8x1xf32>
    %cst_18 = arith.constant dense<0xFF800000> : vector<8xf32>
    %28 = vector.multi_reduction <maximumf>, %9, %cst_18 [1] : vector<8x16xf32> to vector<8xf32>
    %29 = vector.shape_cast %28 : vector<8xf32> to vector<8x1xf32>
    %30 = arith.maximumf %27, %29 : vector<8x1xf32>
    %c0_19 = arith.constant 0 : index
    %c0_20 = arith.constant 0 : index
    %31 = vector.load %arg8[%c0_19, %c0_20] : memref<8x1xf32, #tpu.memory_space<vmem>>, vector<8x1xf32>
    %32 = arith.subf %31, %30 : vector<8x1xf32>
    %33 = math.exp %32 : vector<8x1xf32>
    %34 = vector.broadcast %30 : vector<8x1xf32> to vector<8x16xf32>
    %35 = arith.subf %9, %34 : vector<8x16xf32>
    %36 = math.exp %35 : vector<8x16xf32>
    %c0_21 = arith.constant 0 : index
    %c0_22 = arith.constant 0 : index
    %37 = vector.load %arg9[%c0_21, %c0_22] : memref<8x1xf32, #tpu.memory_space<vmem>>, vector<8x1xf32>
    %38 = arith.mulf %37, %33 : vector<8x1xf32>
    %cst_23 = arith.constant dense<0.000000e+00> : vector<8xf32>
    %39 = vector.multi_reduction <add>, %36, %cst_23 [1] : vector<8x16xf32> to vector<8xf32>
    %40 = vector.shape_cast %39 : vector<8xf32> to vector<8x1xf32>
    %41 = arith.addf %38, %40 : vector<8x1xf32>
    %c0_24 = arith.constant 0 : index
    %c0_25 = arith.constant 0 : index
    %42 = vector.load %arg9[%c0_24, %c0_25] : memref<8x1xf32, #tpu.memory_space<vmem>>, vector<8x1xf32>
    tpu.vector_store %arg9[%c0_24, %c0_25], %41 {strides = array<i32>} : memref<8x1xf32, #tpu.memory_space<vmem>>, vector<8x1xf32>,
    %c0_26 = arith.constant 0 : index
    %c0_27 = arith.constant 0 : index
    %43 = vector.load %arg10[%c0_26, %c0_27] : memref<8x1xf32, #tpu.memory_space<vmem>>, vector<8x1xf32>
    %44 = arith.mulf %43, %33 : vector<8x1xf32>
    %45 = arith.subf %9, %6 : vector<8x16xf32>
    %46 = arith.mulf %36, %45 : vector<8x16xf32>
    %cst_28 = arith.constant dense<0.000000e+00> : vector<8xf32>
    %47 = vector.multi_reduction <add>, %46, %cst_28 [1] : vector<8x16xf32> to vector<8xf32>
    %48 = vector.shape_cast %47 : vector<8xf32> to vector<8x1xf32>
    %49 = arith.addf %44, %48 : vector<8x1xf32>
    %c0_29 = arith.constant 0 : index
    %c0_30 = arith.constant 0 : index
    %50 = vector.load %arg10[%c0_29, %c0_30] : memref<8x1xf32, #tpu.memory_space<vmem>>, vector<8x1xf32>
    tpu.vector_store %arg10[%c0_29, %c0_30], %49 {strides = array<i32>} : memref<8x1xf32, #tpu.memory_space<vmem>>, vector<8x1xf32>,
    %c0_31 = arith.constant 0 : index
    %c0_32 = arith.constant 0 : index
    %51 = vector.load %arg8[%c0_31, %c0_32] : memref<8x1xf32, #tpu.memory_space<vmem>>, vector<8x1xf32>
    tpu.vector_store %arg8[%c0_31, %c0_32], %30 {strides = array<i32>} : memref<8x1xf32, #tpu.memory_space<vmem>>, vector<8x1xf32>,
    %c0_i32_33 = arith.constant 0 : i32
    %52 = arith.cmpi eq, %arg1, %c0_i32_33 : i32
    %53 = arith.extui %52 : i1 to i32
    %c0_i32_34 = arith.constant 0 : i32
    %54 = arith.cmpi ne, %53, %c0_i32_34 : i32
    scf.if %54 {
      %c0_35 = arith.constant 0 : index
      %c0_36 = arith.constant 0 : index
      %55 = vector.load %arg10[%c0_35, %c0_36] : memref<8x1xf32, #tpu.memory_space<vmem>>, vector<8x1xf32>
      %c0_37 = arith.constant 0 : index
      %c0_38 = arith.constant 0 : index
      %56 = vector.load %arg9[%c0_37, %c0_38] : memref<8x1xf32, #tpu.memory_space<vmem>>, vector<8x1xf32>
      %57 = tpu.reciprocal %56 : vector<8x1xf32> -> vector<8x1xf32>
      %58 = arith.mulf %55, %57 : vector<8x1xf32>
      %c0_39 = arith.constant 0 : index
      %c0_40 = arith.constant 0 : index
      %59 = vector.load %arg6[%c0_39, %c0_40] : memref<8x1xf32, #tpu.memory_space<vmem>>, vector<8x1xf32>
      %c0_41 = arith.constant 0 : index
      %c0_42 = arith.constant 0 : index
      %60 = vector.load %arg8[%c0_41, %c0_42] : memref<8x1xf32, #tpu.memory_space<vmem>>, vector<8x1xf32>
      %61 = arith.subf %59, %60 : vector<8x1xf32>
      %62 = arith.addf %58, %61 : vector<8x1xf32>
      %c0_43 = arith.constant 0 : index
      %c0_44 = arith.constant 0 : index
      %63 = vector.load %arg7[%c0_43, %c0_44] : memref<8x1xf32, #tpu.memory_space<vmem>>, vector<8x1xf32>
      %64 = math.log %63 : vector<8x1xf32>
      %c0_45 = arith.constant 0 : index
      %c0_46 = arith.constant 0 : index
      %65 = vector.load %arg9[%c0_45, %c0_46] : memref<8x1xf32, #tpu.memory_space<vmem>>, vector<8x1xf32>
      %66 = math.log %65 : vector<8x1xf32>
      %67 = arith.subf %64, %66 : vector<8x1xf32>
      %68 = arith.addf %62, %67 : vector<8x1xf32>
      %c0_47 = arith.constant 0 : index
      %c0_48 = arith.constant 0 : index
      %69 = vector.load %arg5[%c0_47, %c0_48] : memref<8x1xf32, #tpu.memory_space<vmem>>, vector<8x1xf32>
      tpu.vector_store %arg5[%c0_47, %c0_48], %68 {strides = array<i32>} : memref<8x1xf32, #tpu.memory_space<vmem>>, vector<8x1xf32>,
    } else {
    }
    return
  }
  func.func @transform_0(%arg0: i32, %arg1: i32, %arg2: memref<1xf32, #tpu.memory_space<smem>>) -> (i32, i32) {
    %c0_i32 = arith.constant 0 : i32
    return %arg0, %arg1 : i32, i32
  }
  func.func @transform_1(%arg0: i32, %arg1: i32, %arg2: memref<1xf32, #tpu.memory_space<smem>>) -> (i32, i32) {
    %c0_i32 = arith.constant 0 : i32
    return %arg0, %arg1 : i32, i32
  }
  func.func @transform_2(%arg0: i32, %arg1: i32, %arg2: memref<1xf32, #tpu.memory_space<smem>>) -> (i32, i32) {
    %c0_i32 = arith.constant 0 : i32
    %c0_i32_0 = arith.constant 0 : i32
    return %arg0, %c0_i32 : i32, i32
  }
}

</mosaic_0001>

<llo_original>
// kernel: tpu_custom_call.1
$region0: #{tpu_custom_call.1}
  #allocation0 [shape = 'u32[]', space=smem, size = 0x4, offset = 0x4, fixed_abs, tag = 'smem constant byte address 0x4 - core index']
  #allocation1 [shape = 'u32[144,128]{1,0:T(1,128)}', space=vmem, size = 0x12000, scoped, tag = 'internal scratch']
  #allocation2 [shape = 'f32[8,1]{1,0:T(8,128)}', space=vmem, size = 0x1000, scoped, tag = 'scratch operand']
  #allocation3 [shape = 'f32[8,1]{1,0:T(8,128)}', space=vmem, size = 0x1000, scoped, tag = 'scratch operand']
  #allocation4 [shape = 'f32[8,1]{1,0:T(8,128)}', space=vmem, size = 0x1000, scoped, tag = 'scratch operand']
  #allocation5 [shape = 'f32[8,1]{1,0:T(8,128)}', space=vmem, size = 0x1000, scoped, tag = 'scratch operand']
  #allocation6 [shape = 'f32[8,1]{1,0:T(8,128)}', space=vmem, size = 0x1000, scoped, tag = 'scratch operand']
  #allocation7 [shape = 's32[1]{0}', space=sflag, size = 0x4, scoped, tag = 'scoped memory for tpu_custom_call.1']
  #allocation8 [shape = 'f32[1]{0:T(128)S(6)}', space=smem, size = 0x200, scoped, tag = 'prefetched SMEM operand 0']
  %s0 = inlined_call_operand.<no memory space> [shape: f32[1], index: 0, kind: input, shape index: {}]
  %s1 = inlined_call_operand.hbm [shape: f32[8,16], index: 1, kind: input, shape index: {}]
  %s2 = inlined_call_operand.hbm [shape: f32[8,16], index: 2, kind: input, shape index: {}]
  %s3 = inlined_call_operand.hbm [shape: f32[8,1], index: 3, kind: output, shape index: {}]
  %s4 = sld [smem:[#allocation0]]
  $region34: #{tpu_custom_call.1} parent=0
    _
  %s6 = ssub.s32 1, %s4
  %s7 = scalar_select 0, %s6, %s4
  %8 = sst [smem:[#allocation8]] %s0
  $region1: #{tpu_custom_call.1} parent=0
    #allocation9 [shape = 'u8[4096]{0}', space=vmem, size = 0x1000, scoped, tag = 'input window, operand 1, single buffered']
    #allocation10 [shape = 's32[1]{0}', space=sflag, size = 0x4, scoped, tag = 'scoped memory for tpu_custom_call.1']
    #allocation11 [shape = 's32[1]{0}', space=sflag, size = 0x4, scoped, tag = 'scoped memory for tpu_custom_call.1']
    #allocation12 [shape = 'u8[4096]{0}', space=vmem, size = 0x1000, scoped, tag = 'input window, operand 2, single buffered']
    #allocation13 [shape = 's32[1]{0}', space=sflag, size = 0x4, scoped, tag = 'scoped memory for tpu_custom_call.1']
    #allocation14 [shape = 'u8[4096]{0}', space=vmem, size = 0x1000, scoped, tag = 'output window, operand 0, single buffered']
    %9 = vsyncpa [#allocation10], 0
    %10 = vsyncpa [#allocation13], 0
    %11 = vsyncpa [#allocation11], 0
    // Predicated region
    $region2: #{tpu_custom_call.1} parent=1 // pred_check
      _
    $region3: #{tpu_custom_call.1} parent=1 // pred_check_branch
      %13 = sbr.rel (0) target = $region5
    $region4: #{tpu_custom_call.1} parent=1 // pred_region
      %s15 = ssub.s32 128, 128
      %16 = vsyncadd [#allocation10], %s15
      %s18 = sshll.u32 [#allocation9], 4
      %s19 = int_to_ptr.vmem [resolvable:$true] %s18
      %21 = dma.hbm_to_vmem [thread:$0]  %s1, 128, %s19, [#allocation10]
    $region5: #{tpu_custom_call.1} parent=1 // pred_fallthru
      _
    // Predicated region
    $region6: #{tpu_custom_call.1} parent=1 // pred_check
      _
    $region7: #{tpu_custom_call.1} parent=1 // pred_check_branch
      %23 = sbr.rel (0) target = $region9
    $region8: #{tpu_custom_call.1} parent=1 // pred_region
      %s25 = ssub.s32 128, 128
      %26 = vsyncadd [#allocation13], %s25
      %s28 = sshll.u32 [#allocation12], 4
      %s29 = int_to_ptr.vmem [resolvable:$true] %s28
      %31 = dma.hbm_to_vmem [thread:$0]  %s2, 128, %s29, [#allocation13]
    $region9: #{tpu_custom_call.1} parent=1 // pred_fallthru
      _
    // Predicated region
    $region10: #{tpu_custom_call.1} parent=1 // pred_check
      _
    $region11: #{tpu_custom_call.1} parent=1 // pred_check_branch
      %33 = sbr.rel (0) target = $region13
    $region12: #{tpu_custom_call.1} parent=1 // pred_region
      %34 = dma.done [#allocation10], 128
    $region13: #{tpu_custom_call.1} parent=1 // pred_fallthru
      _
    // Predicated region
    $region14: #{tpu_custom_call.1} parent=1 // pred_check
      _
    $region15: #{tpu_custom_call.1} parent=1 // pred_check_branch
      %36 = sbr.rel (0) target = $region17
    $region16: #{tpu_custom_call.1} parent=1 // pred_region
      %37 = dma.done [#allocation13], 128
    $region17: #{tpu_custom_call.1} parent=1 // pred_fallthru
      _
    %p38 = scmp.eq.s32.totalorder 0, 0
    // Predicated region
    $region18: #{tpu_custom_call.1} parent=1 // pred_check
      %p39 = pneg %p38
    $region19: #{tpu_custom_call.1} parent=1 // pred_check_branch
      %41 = sbr.rel (%p39) target = $region21
    $region20: #{tpu_custom_call.1} parent=1 // pred_region
      %vm42 = vcmask 7168
      %43 = vst.msk [vmem:[#allocation2] sm:$0xff] %vm42, -inf
      %44 = vst.msk [vmem:[#allocation4] sm:$0xff] %vm42, -inf
      %45 = vst.msk [vmem:[#allocation3] sm:$0xff] %vm42, 0.0
      %46 = vst.msk [vmem:[#allocation5] sm:$0xff] %vm42, 0.0
      %47 = vst.msk [vmem:[#allocation6] sm:$0xff] %vm42, 0.0
    $region21: #{tpu_custom_call.1} parent=1 // pred_fallthru
      _
    %s48 = sld [smem:[#allocation8]]
    %v49 = vld [vmem:[#allocation9] sm:$0xff]
    %v50 = vstv %s48
    %v51 = vmul.f32 %v49, %v50
    %v52 = vld [vmem:[#allocation12] sm:$0xff]
    %v53 = vmul.f32 %v52, %v50
    %v54 = vld [vmem:[#allocation2] sm:$0xff]
    %vm55 = vcmask 130048
    %v56 = vsel %vm55, %v51, -inf
    %57 = vmax.xlane.f32.xlu0 %v56
    %v58 = vpop.xlane.xlu0 %57
    %v59 = vmax.f32 %v54, %v58
    %v60 = vld [vmem:[#allocation3] sm:$0xff]
    %v61 = vsub.f32 %v54, %v59
    %v62 = vmul.f32 %v61, 1.442695
    %v63 = vpow.pop %v62
    %v64 = vmul.f32 %v60, %v63
    %66 = vset.pattern.permute.xlu0 0
    %67 = vperm.xlu0 %66, %v59
    %v68 = vpop.permute.xlu0 %67
    %v70 = vsub.f32 %v51, %v68
    %v71 = vmul.f32 %v70, 1.442695
    %v72 = vpow.pop %v71
    %v73 = vsel %vm55, %v72, 0.0
    %74 = vadd.xlane.f32.xlu0 %v73
    %v75 = vpop.xlane.xlu0 %74
    %v76 = vadd.f32 %v64, %v75
    %vm77 = vcmask 7168
    %78 = vst.msk [vmem:[#allocation3] sm:$0xff] %vm77, %v76
    %79 = vst.msk [vmem:[#allocation2] sm:$0xff] %vm77, %v59
    %v80 = vld [vmem:[#allocation4] sm:$0xff]
    %v81 = vsel %vm55, %v53, -inf
    %82 = vmax.xlane.f32.xlu0 %v81
    %v83 = vpop.xlane.xlu0 %82
    %v84 = vmax.f32 %v80, %v83
    %v85 = vsub.f32 %v80, %v84
    %v86 = vmul.f32 %v85, 1.442695
    %v87 = vpow.pop %v86
    %89 = vset.pattern.permute.xlu0 0
    %90 = vperm.xlu0 %89, %v84
    %v91 = vpop.permute.xlu0 %90
    %v93 = vsub.f32 %v53, %v91
    %v94 = vmul.f32 %v93, 1.442695
    %v95 = vpow.pop %v94
    %v96 = vld [vmem:[#allocation5] sm:$0xff]
    %v97 = vmul.f32 %v96, %v87
    %v98 = vsel %vm55, %v95, 0.0
    %99 = vadd.xlane.f32.xlu0 %v98
    %v100 = vpop.xlane.xlu0 %99
    %v101 = vadd.f32 %v97, %v100
    %102 = vst.msk [vmem:[#allocation5] sm:$0xff] %vm77, %v101
    %v103 = vld [vmem:[#allocation6] sm:$0xff]
    %v104 = vmul.f32 %v103, %v87
    %v105 = vsub.f32 %v53, %v51
    %v106 = vmul.f32 %v95, %v105
    %v107 = vsel %vm55, %v106, 0.0
    %108 = vadd.xlane.f32.xlu0 %v107
    %v109 = vpop.xlane.xlu0 %108
    %v110 = vadd.f32 %v104, %v109
    %111 = vst.msk [vmem:[#allocation6] sm:$0xff] %vm77, %v110
    %112 = vst.msk [vmem:[#allocation4] sm:$0xff] %vm77, %v84
    // Predicated region
    $region22: #{tpu_custom_call.1} parent=1 // pred_check
      %p113 = pneg %p38
    $region23: #{tpu_custom_call.1} parent=1 // pred_check_branch
      %115 = sbr.rel (%p113) target = $region25
    $region24: #{tpu_custom_call.1} parent=1 // pred_region
      %v116 = vld [vmem:[#allocation6] sm:$0xff]
      %v117 = vld [vmem:[#allocation5] sm:$0xff]
      %v118 = vrcp.pop %v117
      %v119 = vmul.f32 %v116, %v118
      %v120 = vld [vmem:[#allocation2] sm:$0xff]
      %v121 = vld [vmem:[#allocation4] sm:$0xff]
      %v122 = vsub.f32 %v120, %v121
      %v123 = vadd.f32 %v119, %v122
      %v124 = vld [vmem:[#allocation3] sm:$0xff]
      %v125 = vlog2.pop %v124
      %v126 = vmul.f32 %v125, 0.6931472
      %v127 = vlog2.pop %v117
      %v128 = vmul.f32 %v127, 0.6931472
      %v129 = vsub.f32 %v126, %v128
      %v130 = vadd.f32 %v123, %v129
      %131 = vst.msk [vmem:[#allocation14] sm:$0xff] %vm77, %v130
    $region25: #{tpu_custom_call.1} parent=1 // pred_fallthru
      _
    // Predicated region
    $region26: #{tpu_custom_call.1} parent=1 // pred_check
      _
    $region27: #{tpu_custom_call.1} parent=1 // pred_check_branch
      %133 = sbr.rel (0) target = $region29
    $region28: #{tpu_custom_call.1} parent=1 // pred_region
      %s135 = ssub.s32 128, 128
      %136 = vsyncadd [#allocation11], %s135
      %s138 = sshll.u32 [#allocation14], 4
      %s139 = int_to_ptr.vmem [resolvable:$true] %s138
      %141 = dma.vmem_to_hbm [thread:$0]  %s139, 128, %s3, [#allocation11]
    $region29: #{tpu_custom_call.1} parent=1 // pred_fallthru
      _
    // Predicated region
    $region30: #{tpu_custom_call.1} parent=1 // pred_check
      _
    $region31: #{tpu_custom_call.1} parent=1 // pred_check_branch
      %143 = sbr.rel (0) target = $region33
    $region32: #{tpu_custom_call.1} parent=1 // pred_region
      %144 = dma.done [#allocation11], 128
    $region33: #{tpu_custom_call.1} parent=1 // pred_fallthru
      _
    %145 = vsyncpa [#allocation10], 1
    %146 = vsyncpa [#allocation13], 1
    %147 = vsyncpa [#allocation11], 1

</llo_original>
